<compile_context>
chip_gen: v7x
topology: tpu7x:2x2x1
jax: 0.10.0
libtpu: 0.0.40
codegen_flags: <defaults>
</compile_context>

<pallas_src>
import math

import jax
import jax.numpy as jnp
from jax.experimental import pallas as pl
from jax.experimental.pallas import tpu as pltpu


def _cosine_kernel(x_ref, w_ref, out_ref):
    # x_ref: (tm, E) bf16, rows pre-normalized; w_ref: (E, tn) bf16, columns
    # pre-normalized; out_ref: (tm, tn) f32.  Pure MXU matmul, f32 accumulate.
    out_ref[...] = jnp.dot(x_ref[...], w_ref[...],
                           preferred_element_type=jnp.float32)


def _round_up(x, m):
    return ((x + m - 1) // m) * m


def _vmem_limit_bytes():
    """Generation-aware vmem limit: ~3/4 of physical VMEM, capped at 100 MiB.
    -> ~48 MiB on v7x (64 MiB VMEM/TC), 96 MiB on v5e/v6e (128 MiB VMEM)."""
    cap = 64 * 1024 * 1024  # conservative fallback (safe on every generation)
    try:
        cap = int(pltpu.get_tpu_info().vmem_capacity_bytes)
    except Exception:
        pass
    return min((cap * 3) // 4, 100 * 1024 * 1024)


def arc_margin_forward(features, weight, *, tn_target=1024,
                       compute_dtype=jnp.bfloat16):
    """features: (B, E), weight: (C, E) -> cosine similarities (B, C) f32."""
    B, E = features.shape
    C, E2 = weight.shape
    assert E == E2

    # ---- normalize rows in f32 (eps matches F.normalize) and fold the
    # ---- normalization into the bf16 cast of each operand.
    x32 = features.astype(jnp.float32)
    w32 = weight.astype(jnp.float32)
    inv_x = 1.0 / jnp.maximum(
        jnp.sqrt(jnp.sum(x32 * x32, axis=1, keepdims=True)), 1e-12)   # (B, 1)
    inv_w = 1.0 / jnp.maximum(
        jnp.sqrt(jnp.sum(w32 * w32, axis=1, keepdims=True)), 1e-12)   # (C, 1)
    x_n = (x32 * inv_x).astype(compute_dtype)        # (B, E) bf16
    w_n = (w32 * inv_w).T.astype(compute_dtype)      # (E, C) bf16
    # TODO(synk): in a real module, cache w_n once per parameter update instead
    # of re-normalizing / re-transposing the (C, E) weight on every forward.

    # ---- tile sizes ---------------------------------------------------------
    # tm: bf16-sublane (16) aligned; whole batch in a single row block when it
    #     fits so the much larger weight is streamed from HBM exactly once.
    tm = _round_up(max(B, 1), 16) if B <= 512 else 256
    # tn: lane (128) aligned, large in the weight-streaming regime.
    tn = min(_round_up(tn_target, 128), _round_up(C, 128))

    # Per-block VMEM (double-buffered inputs + output) must fit the budget.
    vmem_limit = _vmem_limit_bytes()
    budget = (vmem_limit * 4) // 5

    def _blk_bytes(tm_, tn_):
        return 2 * (tm_ * E + E * tn_) * 2 + 2 * (tm_ * tn_) * 4

    while tn > 128 and _blk_bytes(tm, tn) > budget:
        tn = max(128, (tn // 2 // 128) * 128)
    while tm > 16 and _blk_bytes(tm, tn) > budget:
        tm = max(16, _round_up(tm // 2, 16))
    # TODO(synk): for very large E (>~16K) add a K grid axis with an f32 VMEM
    # accumulator (pl.when init/finalize) instead of shrinking tiles further.

    # ---- pad ragged B / C to tile multiples (never a full-dim fallback tile).
    Bp, Cp = _round_up(B, tm), _round_up(C, tn)
    if Bp != B:
        x_n = jnp.pad(x_n, ((0, Bp - B), (0, 0)))
    if Cp != C:
        w_n = jnp.pad(w_n, ((0, 0), (0, Cp - C)))

    # Grid: class blocks outer, batch blocks inner -> each weight tile stays
    # resident across all batch blocks (weight read from HBM exactly once).
    grid = (Cp // tn, Bp // tm)

    cost = pl.CostEstimate(
        flops=2 * Bp * Cp * E,
        transcendentals=0,
        bytes_accessed=(Bp * E + E * Cp) * 2 + Bp * Cp * 4,
    )

    out = pl.pallas_call(
        _cosine_kernel,
        out_shape=jax.ShapeDtypeStruct((Bp, Cp), jnp.float32),
        grid_spec=pltpu.PrefetchScalarGridSpec(
            num_scalar_prefetch=0,
            grid=grid,
            in_specs=[
                pl.BlockSpec((tm, E), lambda j, i: (i, 0)),   # features tile
                pl.BlockSpec((E, tn), lambda j, i: (0, j)),   # weight tile
            ],
            out_specs=pl.BlockSpec((tm, tn), lambda j, i: (i, j)),
        ),
        compiler_params=pltpu.CompilerParams(
            dimension_semantics=("parallel", "parallel"),
            vmem_limit_bytes=vmem_limit,
        ),
        cost_estimate=cost,
    )(x_n, w_n)

    return out[:B, :C]


def init_arc_margin_weight(key, in_features, out_features):
    """Matches ArcMarginProduct.reset_parameters: uniform(-1/sqrt(E), 1/sqrt(E))."""
    stdv = 1.0 / math.sqrt(in_features)
    return jax.random.uniform(key, (out_features, in_features),
                              minval=-stdv, maxval=stdv, dtype=jnp.float32)


def arc_margin_reference(features, weight):
    """Pure-JAX reference for F.linear(F.normalize(x), F.normalize(w))."""
    x = features / jnp.maximum(
        jnp.linalg.norm(features, axis=1, keepdims=True), 1e-12)
    w = weight / jnp.maximum(
        jnp.linalg.norm(weight, axis=1, keepdims=True), 1e-12)
    return x @ w.T


if __name__ == "__main__":
    # Small shapes consistent with the module: (B, in_features) x (out_features, in_features).
    B, E, C = 8, 128, 256
    key = jax.random.PRNGKey(0)
    k_x, k_w = jax.random.split(key)

    features = jax.random.normal(k_x, (B, E), dtype=jnp.float32)
    weight = init_arc_margin_weight(k_w, E, C)

    out = jax.block_until_ready(arc_margin_forward(features, weight))
    ref = arc_margin_reference(features, weight)

    assert out.shape == (B, C)
    max_err = jnp.max(jnp.abs(out - ref))
    # bf16 matmul operands with f32 accumulation -> ~1e-3 abs error (grows ~sqrt(E)).
    assert jnp.allclose(out, ref, atol=2e-2, rtol=2e-2), f"mismatch, max abs err={max_err}"

    print("KERNEL_OK")
</pallas_src>

<mosaic_0001>
module attributes {stable_mosaic.version = 11 : i64} {
  func.func @_cosine_kernel(%arg0: i32, %arg1: i32, %arg2: memref<16x128xbf16, #tpu.memory_space<vmem>>, %arg3: memref<128x256xbf16, #tpu.memory_space<vmem>>, %arg4: memref<16x256xf32, #tpu.memory_space<vmem>>) attributes {dimension_semantics = [#tpu.dimension_semantics<parallel>, #tpu.dimension_semantics<parallel>], iteration_bounds = array<i64: 1, 1>, scalar_prefetch = 0 : i64, scratch_operands = 0 : i64, tpu.core_type = #tpu.core_type<tc>, window_params = [{transform_indices = @transform_0, window_bounds = array<i64: 16, 128>}, {transform_indices = @transform_1, window_bounds = array<i64: 128, 256>}, {transform_indices = @transform_2, window_bounds = array<i64: 16, 256>}]} {
    %c0 = arith.constant 0 : index
    %c0_0 = arith.constant 0 : index
    %0 = vector.load %arg2[%c0, %c0_0] : memref<16x128xbf16, #tpu.memory_space<vmem>>, vector<16x128xbf16>
    %c0_1 = arith.constant 0 : index
    %c0_2 = arith.constant 0 : index
    %1 = vector.load %arg3[%c0_1, %c0_2] : memref<128x256xbf16, #tpu.memory_space<vmem>>, vector<128x256xbf16>
    %cst = arith.constant dense<0.000000e+00> : vector<16x256xf32>
    %2 = tpu.matmul %0, %1, %cst {dimension_numbers = #tpu.dot_dimension_numbers<[1], [0], [0], [1], [0, 0, 1, 1], [], []>} : vector<16x128xbf16>, vector<128x256xbf16>, vector<16x256xf32> -> vector<16x256xf32>
    %c0_3 = arith.constant 0 : index
    %c0_4 = arith.constant 0 : index
    %3 = vector.load %arg4[%c0_3, %c0_4] : memref<16x256xf32, #tpu.memory_space<vmem>>, vector<16x256xf32>
    tpu.vector_store %arg4[%c0_3, %c0_4], %2 {strides = array<i32>} : memref<16x256xf32, #tpu.memory_space<vmem>>, vector<16x256xf32>,
    return
  }
  func.func @transform_0(%arg0: i32, %arg1: i32) -> (i32, i32) {
    %c0_i32 = arith.constant 0 : i32
    %c0_i32_0 = arith.constant 0 : i32
    return %arg1, %c0_i32 : i32, i32
  }
  func.func @transform_1(%arg0: i32, %arg1: i32) -> (i32, i32) {
    %c0_i32 = arith.constant 0 : i32
    %c0_i32_0 = arith.constant 0 : i32
    return %c0_i32, %arg0 : i32, i32
  }
  func.func @transform_2(%arg0: i32, %arg1: i32) -> (i32, i32) {
    %c0_i32 = arith.constant 0 : i32
    return %arg1, %arg0 : i32, i32
  }
}

</mosaic_0001>

<llo_original>
// kernel: tpu_custom_call.1
$region0: #{tpu_custom_call.1}
  #allocation0 [shape = 'u32[]', space=smem, size = 0x4, offset = 0x4, fixed_abs, tag = 'smem constant byte address 0x4 - core index']
  #allocation1 [shape = 'u32[144,128]{1,0:T(1,128)}', space=vmem, size = 0x12000, scoped, tag = 'internal scratch']
  %s0 = inlined_call_operand.hbm [shape: bf16[16,128], index: 0, kind: input, shape index: {}]
  %s1 = inlined_call_operand.hbm [shape: bf16[128,256], index: 1, kind: input, shape index: {}]
  %s2 = inlined_call_operand.hbm [shape: f32[16,256], index: 2, kind: output, shape index: {}]
  %s3 = sld [smem:[#allocation0]]
  $region26: #{tpu_custom_call.1} parent=0
    _
  %s5 = ssub.s32 1, %s3
  %s6 = scalar_select 0, %s5, %s3
  $region1: #{tpu_custom_call.1} parent=0
    #allocation2 [shape = 'u8[4096]{0}', space=vmem, size = 0x1000, scoped, tag = 'input window, operand 0, single buffered']
    #allocation3 [shape = 's32[1]{0}', space=sflag, size = 0x4, scoped, tag = 'scoped memory for tpu_custom_call.1']
    #allocation4 [shape = 's32[1]{0}', space=sflag, size = 0x4, scoped, tag = 'scoped memory for tpu_custom_call.1']
    #allocation5 [shape = 'u8[65536]{0}', space=vmem, size = 0x10000, scoped, tag = 'input window, operand 1, single buffered']
    #allocation6 [shape = 's32[1]{0}', space=sflag, size = 0x4, scoped, tag = 'scoped memory for tpu_custom_call.1']
    #allocation7 [shape = 'u8[16384]{0}', space=vmem, size = 0x4000, scoped, tag = 'output window, operand 0, single buffered']
    %7 = vsyncpa [#allocation3], 0
    %8 = vsyncpa [#allocation6], 0
    %9 = vsyncpa [#allocation4], 0
    // Predicated region
    $region2: #{tpu_custom_call.1} parent=1 // pred_check
      _
    $region3: #{tpu_custom_call.1} parent=1 // pred_check_branch
      %11 = sbr.rel (0) target = $region5
    $region4: #{tpu_custom_call.1} parent=1 // pred_region
      %s13 = ssub.s32 128, 128
      %14 = vsyncadd [#allocation3], %s13
      %s15 = sshll.u32 [#allocation2], 4
      %s16 = int_to_ptr.vmem [resolvable:$true] %s15
      %21 = dma.hbm_to_vmem [thread:$0]  %s0, 128, %s16, [#allocation3], 64, 64, 4
    $region5: #{tpu_custom_call.1} parent=1 // pred_fallthru
      _
    // Predicated region
    $region6: #{tpu_custom_call.1} parent=1 // pred_check
      _
    $region7: #{tpu_custom_call.1} parent=1 // pred_check_branch
      %23 = sbr.rel (0) target = $region9
    $region8: #{tpu_custom_call.1} parent=1 // pred_region
      %s25 = ssub.s32 2048, 2048
      %26 = vsyncadd [#allocation6], %s25
      %s27 = sshll.u32 [#allocation5], 4
      %s28 = int_to_ptr.vmem [resolvable:$true] %s27
      %33 = dma.hbm_to_vmem [thread:$0]  %s1, 2048, %s28, [#allocation6], 128, 128, 8
    $region9: #{tpu_custom_call.1} parent=1 // pred_fallthru
      _
    // Predicated region
    $region10: #{tpu_custom_call.1} parent=1 // pred_check
      _
    $region11: #{tpu_custom_call.1} parent=1 // pred_check_branch
      %35 = sbr.rel (0) target = $region13
    $region12: #{tpu_custom_call.1} parent=1 // pred_region
      %36 = dma.done [#allocation3], 128
    $region13: #{tpu_custom_call.1} parent=1 // pred_fallthru
      _
    // Predicated region
    $region14: #{tpu_custom_call.1} parent=1 // pred_check
      _
    $region15: #{tpu_custom_call.1} parent=1 // pred_check_branch
      %38 = sbr.rel (0) target = $region17
    $region16: #{tpu_custom_call.1} parent=1 // pred_region
      %39 = dma.done [#allocation6], 2048
    $region17: #{tpu_custom_call.1} parent=1 // pred_fallthru
      _
    %v41 = vld [vmem:[#allocation2] sm:$0xf]
    %v42 = vld [vmem:[#allocation2 + $0x4] sm:$0xf]
    %v43 = vld [vmem:[#allocation5] sm:$0xff]
    %v44 = vld [vmem:[#allocation5 + $0x8] sm:$0xff]
    %v45 = vld [vmem:[#allocation5 + $0x10] sm:$0xff]
    %v46 = vld [vmem:[#allocation5 + $0x18] sm:$0xff]
    %v47 = vld [vmem:[#allocation5 + $0x20] sm:$0xff]
    %v48 = vld [vmem:[#allocation5 + $0x28] sm:$0xff]
    %v49 = vld [vmem:[#allocation5 + $0x30] sm:$0xff]
    %v50 = vld [vmem:[#allocation5 + $0x38] sm:$0xff]
    %v51 = vld [vmem:[#allocation5 + $0x40] sm:$0xff]
    %v52 = vld [vmem:[#allocation5 + $0x48] sm:$0xff]
    %v53 = vld [vmem:[#allocation5 + $0x50] sm:$0xff]
    %v54 = vld [vmem:[#allocation5 + $0x58] sm:$0xff]
    %v55 = vld [vmem:[#allocation5 + $0x60] sm:$0xff]
    %v56 = vld [vmem:[#allocation5 + $0x68] sm:$0xff]
    %v57 = vld [vmem:[#allocation5 + $0x70] sm:$0xff]
    %v58 = vld [vmem:[#allocation5 + $0x78] sm:$0xff]
    %v61 = vunpack.c.l.b16 %v41
    %v62 = vunpack.c.l.b16 %v42
    %v63 = vpack.c.b16 %v62, %v61
    %v81 = vunpack.c.l.b16 %v43
    %v82 = vunpack.c.h.b16 %v43
    %v83 = vunpack.c.l.b16 %v44
    %v84 = vunpack.c.h.b16 %v44
    %v85 = vunpack.c.l.b16 %v45
    %v86 = vunpack.c.h.b16 %v45
    %v87 = vunpack.c.l.b16 %v46
    %v88 = vunpack.c.h.b16 %v46
    %v89 = vunpack.c.l.b16 %v47
    %v90 = vunpack.c.h.b16 %v47
    %v91 = vunpack.c.l.b16 %v48
    %v92 = vunpack.c.h.b16 %v48
    %v93 = vunpack.c.l.b16 %v49
    %v94 = vunpack.c.h.b16 %v49
    %v95 = vunpack.c.l.b16 %v50
    %v96 = vunpack.c.h.b16 %v50
    %v97 = vunpack.c.l.b16 %v51
    %v98 = vunpack.c.h.b16 %v51
    %v99 = vunpack.c.l.b16 %v52
    %v100 = vunpack.c.h.b16 %v52
    %v101 = vunpack.c.l.b16 %v53
    %v102 = vunpack.c.h.b16 %v53
    %v103 = vunpack.c.l.b16 %v54
    %v104 = vunpack.c.h.b16 %v54
    %v105 = vunpack.c.l.b16 %v55
    %v106 = vunpack.c.h.b16 %v55
    %v107 = vunpack.c.l.b16 %v56
    %v108 = vunpack.c.h.b16 %v56
    %v109 = vunpack.c.l.b16 %v57
    %v110 = vunpack.c.h.b16 %v57
    %v111 = vunpack.c.l.b16 %v58
    %v112 = vunpack.c.h.b16 %v58
    %v113 = vpack.c.b16 %v83, %v81
    %v114 = vpack.c.b16 %v84, %v82
    %v115 = vpack.c.b16 %v87, %v85
    %v116 = vpack.c.b16 %v88, %v86
    %v117 = vpack.c.b16 %v91, %v89
    %v118 = vpack.c.b16 %v92, %v90
    %v119 = vpack.c.b16 %v95, %v93
    %v120 = vpack.c.b16 %v96, %v94
    %v121 = vpack.c.b16 %v99, %v97
    %v122 = vpack.c.b16 %v100, %v98
    %v123 = vpack.c.b16 %v103, %v101
    %v124 = vpack.c.b16 %v104, %v102
    %v125 = vpack.c.b16 %v107, %v105
    %v126 = vpack.c.b16 %v108, %v106
    %v127 = vpack.c.b16 %v111, %v109
    %v128 = vpack.c.b16 %v112, %v110
    %145 = vmatprep.subr.bf16.mxu0 %v114
    %146 = vmatpush1.bf16.msra.mxu0 %v113
    %147 = vmatprep.subr.bf16.mxu0 %v116
    %148 = vmatpush1.bf16.msra.mxu0 %v115
    %149 = vmatprep.subr.bf16.mxu0 %v118
    %150 = vmatpush1.bf16.msra.mxu0 %v117
    %151 = vmatprep.subr.bf16.mxu0 %v120
    %152 = vmatpush1.bf16.msra.mxu0 %v119
    %153 = vmatprep.subr.bf16.mxu0 %v122
    %154 = vmatpush1.bf16.msra.mxu0 %v121
    %155 = vmatprep.subr.bf16.mxu0 %v124
    %156 = vmatpush1.bf16.msra.mxu0 %v123
    %157 = vmatprep.subr.bf16.mxu0 %v126
    %158 = vmatpush1.bf16.msra.mxu0 %v125
    %159 = vmatprep.subr.bf16.mxu0 %v128
    %160 = vmatpush1.bf16.msra.mxu0 %v127
    %161 = vmatprep.subr.bf16.mxu0 0
    %162 = vmatpush1.bf16.msra.mxu0 0
    %163 = vmatprep.subr.bf16.mxu0 0
    %164 = vmatpush1.bf16.msra.mxu0 0
    %165 = vmatprep.subr.bf16.mxu0 0
    %166 = vmatpush1.bf16.msra.mxu0 0
    %167 = vmatprep.subr.bf16.mxu0 0
    %168 = vmatpush1.bf16.msra.mxu0 0
    %169 = vmatprep.subr.bf16.mxu0 0
    %170 = vmatpush1.bf16.msra.mxu0 0
    %171 = vmatprep.subr.bf16.mxu0 0
    %172 = vmatpush1.bf16.msra.mxu0 0
    %173 = vmatprep.subr.bf16.mxu0 0
    %174 = vmatpush1.bf16.msra.mxu0 0
    %175 = vmatprep.subr.bf16.mxu0 0
    %176 = vmatpush1.bf16.msra.mxu0 0
    %177 = vmatprep.mubr.bf16.mxu0 0
    %178 = vmatmul.mubr.bf16.gmra.mrb[0].mxu0 %v63
    %v179 = vpop.f32.mrb[0].mxu0
    %v180 = vadd.f32 0.0, %v179
    %v181 = vpop.f32.mrb[0].mxu0
    %v182 = vadd.f32 0.0, %v181
    %v183 = vpop.f32.mrb[0].mxu0
    %v184 = vadd.f32 0.0, %v183
    %v185 = vpop.f32.mrb[0].mxu0
    %v186 = vadd.f32 0.0, %v185
    %187 = vdwg.mxu0
    %188 = vst [vmem:[#allocation7] sm:$0xff] %v180
    %189 = vst [vmem:[#allocation7 + $0x8] sm:$0xff] %v182
    %190 = vst [vmem:[#allocation7 + $0x10] sm:$0xff] %v184
    %191 = vst [vmem:[#allocation7 + $0x18] sm:$0xff] %v186
    // Predicated region
    $region18: #{tpu_custom_call.1} parent=1 // pred_check
      _
    $region19: #{tpu_custom_call.1} parent=1 // pred_check_branch
      %193 = sbr.rel (0) target = $region21
    $region20: #{tpu_custom_call.1} parent=1 // pred_region
      %s195 = ssub.s32 512, 512
      %196 = vsyncadd [#allocation4], %s195
      %s197 = sshll.u32 [#allocation7], 4
      %s198 = int_to_ptr.vmem [resolvable:$true] %s197
      %203 = dma.vmem_to_hbm [thread:$0]  %s198, 512, %s2, [#allocation4], 256, 256, 16
    $region21: #{tpu_custom_call.1} parent=1 // pred_fallthru
      _
    // Predicated region
    $region22: #{tpu_custom_call.1} parent=1 // pred_check
      _
    $region23: #{tpu_custom_call.1} parent=1 // pred_check_branch
      %205 = sbr.rel (0) target = $region25
    $region24: #{tpu_custom_call.1} parent=1 // pred_region
      %206 = dma.done [#allocation4], 512
    $region25: #{tpu_custom_call.1} parent=1 // pred_fallthru
      _
    %207 = vsyncpa [#allocation3], 1
    %208 = vsyncpa [#allocation6], 1
    %209 = vsyncpa [#allocation4], 1

</llo_original>
